<compile_context>
chip_gen: v6e
topology: v6e:2x2x1
jax: 0.10.0
libtpu: 0.0.40
codegen_flags: <defaults>
</compile_context>

<pallas_src>
import jax
import jax.numpy as jnp
from jax.experimental import pallas as pl
from jax.experimental.pallas import tpu as pltpu


# ---------------------------------------------------------------------------
# Kernel
# ---------------------------------------------------------------------------
def actor_kernel(s_ref,
                 w0_ref, b0_ref,
                 w1_ref, b1_ref,
                 w2_ref, b2_ref,
                 w3_ref, b3_ref,
                 out_ref):
    # Hoist bias loads (f32) once per grid step.
    b0 = b0_ref[...]
    b1 = b1_ref[...]
    b2 = b2_ref[...]
    b3 = b3_ref[...]

    # Layer 0: Linear (bf16 MXU, f32 acc) + ReLU, cast live value to bf16.
    x = s_ref[...].astype(jnp.bfloat16)
    h = jnp.dot(x, w0_ref[...], preferred_element_type=jnp.float32)
    h = jnp.maximum(h + b0, 0.0).astype(jnp.bfloat16)
    # Layer 1
    h = jnp.dot(h, w1_ref[...], preferred_element_type=jnp.float32)
    h = jnp.maximum(h + b1, 0.0).astype(jnp.bfloat16)
    # Layer 2
    h = jnp.dot(h, w2_ref[...], preferred_element_type=jnp.float32)
    h = jnp.maximum(h + b2, 0.0).astype(jnp.bfloat16)
    # Output head: Linear + tanh, narrow (out_dim-wide) f32 store.
    o = jnp.dot(h, w3_ref[...], preferred_element_type=jnp.float32)
    out_ref[...] = jnp.tanh(o + b3).astype(out_ref.dtype)


# ---------------------------------------------------------------------------
# Wrapper
# ---------------------------------------------------------------------------
def _round_up(x, m):
    return ((x + m - 1) // m) * m


def _cdiv(a, b):
    return (a + b - 1) // b


def _prepare_params(params, lane=128):
    """Pad hidden widths to 128 lanes (not the final head), cast W to bf16.

    params: list of (W_T with shape (in_dim, out_dim), b with shape (1, out_dim)),
            both float32. Returns list of (W_T_padded bf16, b_padded f32).
    """
    n = len(params)
    padded = []
    prev_pad_out = None
    for idx, (w, b) in enumerate(params):
        in_dim, out_dim = w.shape
        pad_in = in_dim if idx == 0 else prev_pad_out
        # Hidden layers: lane-dense 128 wide.  Final head: keep the true
        # out_dim so the output store / HBM writeback is not inflated.
        pad_out = out_dim if idx == n - 1 else _round_up(out_dim, lane)
        w_p = jnp.zeros((pad_in, pad_out), jnp.float32)
        w_p = w_p.at[:in_dim, :out_dim].set(w)
        b_p = jnp.zeros((1, pad_out), jnp.float32)
        b_p = b_p.at[:, :out_dim].set(b.reshape(1, -1))
        padded.append((w_p.astype(jnp.bfloat16), b_p))
        prev_pad_out = pad_out
    return padded


def actor_forward(s, params, num_disc, param_dim, tile_b_max=2048):
    """s: (B, s_dim) float32. params: list of (W_T (in,out), b (1,out)) float32."""
    B, s_dim = s.shape
    out_dim = num_disc * param_dim

    padded_params = _prepare_params(params)
    assert padded_params[-1][0].shape[1] == out_dim

    # Balanced batch tiles: pick the tile count first so batch padding stays
    # under 8 rows for any B, then round the tile to a sublane multiple.
    n_tiles = _cdiv(B, tile_b_max)
    # v7x megacore: keep >=2 "parallel" tiles for non-trivial batches so the
    # second TensorCore is not idle.
    if n_tiles == 1 and B >= 256:
        n_tiles = 2
    tile_b = _round_up(_cdiv(B, n_tiles), 8)
    b_pad = n_tiles * tile_b
    if b_pad != B:
        s = jnp.pad(s, ((0, b_pad - B), (0, 0)))

    flat_args = [s]
    in_specs = [pl.BlockSpec((tile_b, s_dim), lambda i: (i, 0))]
    for w, b in padded_params:
        flat_args += [w, b]
        # Weights/biases: same (0,0) block every step -> resident in VMEM.
        in_specs += [pl.BlockSpec(w.shape, lambda i: (0, 0)),
                     pl.BlockSpec(b.shape, lambda i: (0, 0))]

    out = pl.pallas_call(
        actor_kernel,
        grid=(n_tiles,),
        out_shape=jax.ShapeDtypeStruct((b_pad, out_dim), jnp.float32),
        in_specs=in_specs,
        # Last block dim equals the full array dim (out_dim), so a narrow
        # (non-128) output block is legal and avoids 16x writeback inflation.
        out_specs=pl.BlockSpec((tile_b, out_dim), lambda i: (i, 0)),
        compiler_params=pltpu.CompilerParams(
            dimension_semantics=("parallel",),
        ),
    )(*flat_args)

    # Glue: drop batch padding, then view(-1, num_disc, param_dim).
    return out[:B].reshape(B, num_disc, param_dim)


# ---------------------------------------------------------------------------
# Reference / init
# ---------------------------------------------------------------------------
def init_linear(key, in_dim, out_dim):
    """Deterministic init matching PyTorch Linear shapes (W stored transposed)."""
    kw, kb = jax.random.split(key)
    bound = 1.0 / jnp.sqrt(jnp.float32(in_dim))
    w_t = jax.random.uniform(kw, (in_dim, out_dim), jnp.float32, -bound, bound)
    b = jax.random.uniform(kb, (1, out_dim), jnp.float32, -bound, bound)
    return w_t, b


def reference_forward(s, params, num_disc, param_dim):
    h = s
    for i, (w, b) in enumerate(params):
        h = h @ w + b
        if i < len(params) - 1:
            h = jnp.maximum(h, 0.0)
    return jnp.tanh(h).reshape(-1, num_disc, param_dim)


if __name__ == "__main__":
    # Small, forward-consistent shapes.
    batch = 8
    s_dim = 16
    num_disc = 4
    param_dim = 2
    hidden = (64, 64, 64)

    key = jax.random.PRNGKey(0)
    k_s, k0, k1, k2, k3 = jax.random.split(key, 5)

    s = jax.random.normal(k_s, (batch, s_dim), jnp.float32)

    dims = [s_dim] + list(hidden) + [num_disc * param_dim]
    keys = [k0, k1, k2, k3]
    params = [init_linear(keys[i], dims[i], dims[i + 1]) for i in range(4)]

    out = actor_forward(s, params, num_disc, param_dim)
    out = jax.block_until_ready(out)

    ref = reference_forward(s, params, num_disc, param_dim)
    assert out.shape == (batch, num_disc, param_dim)
    # bf16 MXU inputs (f32 accumulate) -> compare against f32 reference with a
    # correspondingly looser tolerance; tanh output is in [-1, 1].
    assert jnp.allclose(out, ref, atol=2e-2, rtol=2e-2), (
        float(jnp.max(jnp.abs(out - ref))))

    # Also exercise an uneven, larger batch (multi-tile, "parallel" grid path).
    big_b = 520
    s_big = jax.random.normal(k_s, (big_b, s_dim), jnp.float32)
    out_big = jax.block_until_ready(
        actor_forward(s_big, params, num_disc, param_dim))
    ref_big = reference_forward(s_big, params, num_disc, param_dim)
    assert out_big.shape == (big_b, num_disc, param_dim)
    assert jnp.allclose(out_big, ref_big, atol=2e-2, rtol=2e-2), (
        float(jnp.max(jnp.abs(out_big - ref_big))))

    print("KERNEL_OK")
</pallas_src>

<mosaic_0001>
module attributes {stable_mosaic.version = 11 : i64} {
  func.func @actor_kernel(%arg0: i32, %arg1: memref<8x16xf32, #tpu.memory_space<vmem>>, %arg2: memref<16x128xbf16, #tpu.memory_space<vmem>>, %arg3: memref<1x128xf32, #tpu.memory_space<vmem>>, %arg4: memref<128x128xbf16, #tpu.memory_space<vmem>>, %arg5: memref<1x128xf32, #tpu.memory_space<vmem>>, %arg6: memref<128x128xbf16, #tpu.memory_space<vmem>>, %arg7: memref<1x128xf32, #tpu.memory_space<vmem>>, %arg8: memref<128x8xbf16, #tpu.memory_space<vmem>>, %arg9: memref<1x8xf32, #tpu.memory_space<vmem>>, %arg10: memref<8x8xf32, #tpu.memory_space<vmem>>) attributes {dimension_semantics = [#tpu.dimension_semantics<parallel>], iteration_bounds = array<i64: 1>, scalar_prefetch = 0 : i64, scratch_operands = 0 : i64, tpu.core_type = #tpu.core_type<tc>, window_params = [{transform_indices = @transform_0, window_bounds = array<i64: 8, 16>}, {pipeline_mode = #tpu.pipeline_mode<synchronous>, transform_indices = @transform_1, window_bounds = array<i64: 16, 128>}, {pipeline_mode = #tpu.pipeline_mode<synchronous>, transform_indices = @transform_2, window_bounds = array<i64: 1, 128>}, {pipeline_mode = #tpu.pipeline_mode<synchronous>, transform_indices = @transform_3, window_bounds = array<i64: 128, 128>}, {pipeline_mode = #tpu.pipeline_mode<synchronous>, transform_indices = @transform_4, window_bounds = array<i64: 1, 128>}, {pipeline_mode = #tpu.pipeline_mode<synchronous>, transform_indices = @transform_5, window_bounds = array<i64: 128, 128>}, {pipeline_mode = #tpu.pipeline_mode<synchronous>, transform_indices = @transform_6, window_bounds = array<i64: 1, 128>}, {pipeline_mode = #tpu.pipeline_mode<synchronous>, transform_indices = @transform_7, window_bounds = array<i64: 128, 8>}, {pipeline_mode = #tpu.pipeline_mode<synchronous>, transform_indices = @transform_8, window_bounds = array<i64: 1, 8>}, {transform_indices = @transform_9, window_bounds = array<i64: 8, 8>}]} {
    %c0 = arith.constant 0 : index
    %c0_0 = arith.constant 0 : index
    %0 = vector.load %arg3[%c0, %c0_0] : memref<1x128xf32, #tpu.memory_space<vmem>>, vector<1x128xf32>
    %c0_1 = arith.constant 0 : index
    %c0_2 = arith.constant 0 : index
    %1 = vector.load %arg5[%c0_1, %c0_2] : memref<1x128xf32, #tpu.memory_space<vmem>>, vector<1x128xf32>
    %c0_3 = arith.constant 0 : index
    %c0_4 = arith.constant 0 : index
    %2 = vector.load %arg7[%c0_3, %c0_4] : memref<1x128xf32, #tpu.memory_space<vmem>>, vector<1x128xf32>
    %c0_5 = arith.constant 0 : index
    %c0_6 = arith.constant 0 : index
    %3 = vector.load %arg9[%c0_5, %c0_6] : memref<1x8xf32, #tpu.memory_space<vmem>>, vector<1x8xf32>
    %c0_7 = arith.constant 0 : index
    %c0_8 = arith.constant 0 : index
    %4 = vector.load %arg1[%c0_7, %c0_8] : memref<8x16xf32, #tpu.memory_space<vmem>>, vector<8x16xf32>
    %5 = arith.truncf %4 : vector<8x16xf32> to vector<8x16xbf16>
    %c0_9 = arith.constant 0 : index
    %c0_10 = arith.constant 0 : index
    %6 = vector.load %arg2[%c0_9, %c0_10] : memref<16x128xbf16, #tpu.memory_space<vmem>>, vector<16x128xbf16>
    %cst = arith.constant dense<0.000000e+00> : vector<8x128xf32>
    %7 = tpu.matmul %5, %6, %cst {dimension_numbers = #tpu.dot_dimension_numbers<[1], [0], [0], [1], [0, 0, 1, 1], [], []>} : vector<8x16xbf16>, vector<16x128xbf16>, vector<8x128xf32> -> vector<8x128xf32>
    %8 = vector.broadcast %0 : vector<1x128xf32> to vector<8x128xf32>
    %9 = arith.addf %7, %8 : vector<8x128xf32>
    %cst_11 = arith.constant 0.000000e+00 : f32
    %10 = vector.broadcast %cst_11 : f32 to vector<8x128xf32>
    %11 = arith.maximumf %9, %10 : vector<8x128xf32>
    %12 = arith.truncf %11 : vector<8x128xf32> to vector<8x128xbf16>
    %c0_12 = arith.constant 0 : index
    %c0_13 = arith.constant 0 : index
    %13 = vector.load %arg4[%c0_12, %c0_13] : memref<128x128xbf16, #tpu.memory_space<vmem>>, vector<128x128xbf16>
    %cst_14 = arith.constant dense<0.000000e+00> : vector<8x128xf32>
    %14 = tpu.matmul %12, %13, %cst_14 {dimension_numbers = #tpu.dot_dimension_numbers<[1], [0], [0], [1], [0, 0, 1, 1], [], []>} : vector<8x128xbf16>, vector<128x128xbf16>, vector<8x128xf32> -> vector<8x128xf32>
    %15 = vector.broadcast %1 : vector<1x128xf32> to vector<8x128xf32>
    %16 = arith.addf %14, %15 : vector<8x128xf32>
    %cst_15 = arith.constant 0.000000e+00 : f32
    %17 = vector.broadcast %cst_15 : f32 to vector<8x128xf32>
    %18 = arith.maximumf %16, %17 : vector<8x128xf32>
    %19 = arith.truncf %18 : vector<8x128xf32> to vector<8x128xbf16>
    %c0_16 = arith.constant 0 : index
    %c0_17 = arith.constant 0 : index
    %20 = vector.load %arg6[%c0_16, %c0_17] : memref<128x128xbf16, #tpu.memory_space<vmem>>, vector<128x128xbf16>
    %cst_18 = arith.constant dense<0.000000e+00> : vector<8x128xf32>
    %21 = tpu.matmul %19, %20, %cst_18 {dimension_numbers = #tpu.dot_dimension_numbers<[1], [0], [0], [1], [0, 0, 1, 1], [], []>} : vector<8x128xbf16>, vector<128x128xbf16>, vector<8x128xf32> -> vector<8x128xf32>
    %22 = vector.broadcast %2 : vector<1x128xf32> to vector<8x128xf32>
    %23 = arith.addf %21, %22 : vector<8x128xf32>
    %cst_19 = arith.constant 0.000000e+00 : f32
    %24 = vector.broadcast %cst_19 : f32 to vector<8x128xf32>
    %25 = arith.maximumf %23, %24 : vector<8x128xf32>
    %26 = arith.truncf %25 : vector<8x128xf32> to vector<8x128xbf16>
    %c0_20 = arith.constant 0 : index
    %c0_21 = arith.constant 0 : index
    %27 = vector.load %arg8[%c0_20, %c0_21] : memref<128x8xbf16, #tpu.memory_space<vmem>>, vector<128x8xbf16>
    %cst_22 = arith.constant dense<0.000000e+00> : vector<8x8xf32>
    %28 = tpu.matmul %26, %27, %cst_22 {dimension_numbers = #tpu.dot_dimension_numbers<[1], [0], [0], [1], [0, 0, 1, 1], [], []>} : vector<8x128xbf16>, vector<128x8xbf16>, vector<8x8xf32> -> vector<8x8xf32>
    %29 = vector.broadcast %3 : vector<1x8xf32> to vector<8x8xf32>
    %30 = arith.addf %28, %29 : vector<8x8xf32>
    %31 = math.tanh %30 : vector<8x8xf32>
    %c0_23 = arith.constant 0 : index
    %c0_24 = arith.constant 0 : index
    %32 = vector.load %arg10[%c0_23, %c0_24] : memref<8x8xf32, #tpu.memory_space<vmem>>, vector<8x8xf32>
    tpu.vector_store %arg10[%c0_23, %c0_24], %31 {strides = array<i32>} : memref<8x8xf32, #tpu.memory_space<vmem>>, vector<8x8xf32>,
    return
  }
  func.func @transform_0(%arg0: i32) -> (i32, i32) {
    %c0_i32 = arith.constant 0 : i32
    %c0_i32_0 = arith.constant 0 : i32
    return %arg0, %c0_i32 : i32, i32
  }
  func.func @transform_1(%arg0: i32) -> (i32, i32) {
    %c0_i32 = arith.constant 0 : i32
    %c0_i32_0 = arith.constant 0 : i32
    %c0_i32_1 = arith.constant 0 : i32
    return %c0_i32, %c0_i32_0 : i32, i32
  }
  func.func @transform_2(%arg0: i32) -> (i32, i32) {
    %c0_i32 = arith.constant 0 : i32
    %c0_i32_0 = arith.constant 0 : i32
    %c0_i32_1 = arith.constant 0 : i32
    return %c0_i32, %c0_i32_0 : i32, i32
  }
  func.func @transform_3(%arg0: i32) -> (i32, i32) {
    %c0_i32 = arith.constant 0 : i32
    %c0_i32_0 = arith.constant 0 : i32
    %c0_i32_1 = arith.constant 0 : i32
    return %c0_i32, %c0_i32_0 : i32, i32
  }
  func.func @transform_4(%arg0: i32) -> (i32, i32) {
    %c0_i32 = arith.constant 0 : i32
    %c0_i32_0 = arith.constant 0 : i32
    %c0_i32_1 = arith.constant 0 : i32
    return %c0_i32, %c0_i32_0 : i32, i32
  }
  func.func @transform_5(%arg0: i32) -> (i32, i32) {
    %c0_i32 = arith.constant 0 : i32
    %c0_i32_0 = arith.constant 0 : i32
    %c0_i32_1 = arith.constant 0 : i32
    return %c0_i32, %c0_i32_0 : i32, i32
  }
  func.func @transform_6(%arg0: i32) -> (i32, i32) {
    %c0_i32 = arith.constant 0 : i32
    %c0_i32_0 = arith.constant 0 : i32
    %c0_i32_1 = arith.constant 0 : i32
    return %c0_i32, %c0_i32_0 : i32, i32
  }
  func.func @transform_7(%arg0: i32) -> (i32, i32) {
    %c0_i32 = arith.constant 0 : i32
    %c0_i32_0 = arith.constant 0 : i32
    %c0_i32_1 = arith.constant 0 : i32
    return %c0_i32, %c0_i32_0 : i32, i32
  }
  func.func @transform_8(%arg0: i32) -> (i32, i32) {
    %c0_i32 = arith.constant 0 : i32
    %c0_i32_0 = arith.constant 0 : i32
    %c0_i32_1 = arith.constant 0 : i32
    return %c0_i32, %c0_i32_0 : i32, i32
  }
  func.func @transform_9(%arg0: i32) -> (i32, i32) {
    %c0_i32 = arith.constant 0 : i32
    %c0_i32_0 = arith.constant 0 : i32
    return %arg0, %c0_i32 : i32, i32
  }
}

</mosaic_0001>

<llo_original>
// kernel: tpu_custom_call.1
$region0: #{tpu_custom_call.1}
  #allocation0 [shape = 'u32[]', space=smem, size = 0x4, offset = 0x4, fixed_abs, tag = 'smem constant byte address 0x4 - core index']
  #allocation1 [shape = 'u32[144,128]{1,0:T(1,128)}', space=vmem, size = 0x12000, scoped, tag = 'internal scratch']
  %s0 = inlined_call_operand.vmem [shape: f32[8,16], index: 0, kind: input, shape index: {}]
  %s1 = inlined_call_operand.hbm [shape: bf16[16,128], index: 1, kind: input, shape index: {}]
  %s2 = inlined_call_operand.vmem [shape: f32[1,128], index: 2, kind: input, shape index: {}]
  %s3 = inlined_call_operand.vmem [shape: bf16[128,128], index: 3, kind: input, shape index: {}]
  %s4 = inlined_call_operand.hbm [shape: f32[1,128], index: 4, kind: input, shape index: {}]
  %s5 = inlined_call_operand.hbm [shape: bf16[128,128], index: 5, kind: input, shape index: {}]
  %s6 = inlined_call_operand.vmem [shape: f32[1,128], index: 6, kind: input, shape index: {}]
  %s7 = inlined_call_operand.vmem [shape: bf16[128,8], index: 7, kind: input, shape index: {}]
  %s8 = inlined_call_operand.vmem [shape: f32[1,8], index: 8, kind: input, shape index: {}]
  %s9 = inlined_call_operand.hbm [shape: f32[8,8], index: 9, kind: output, shape index: {}]
  %s10 = sld [smem:[#allocation0]]
  $region58: #{tpu_custom_call.1} parent=0
    _
  %s12 = ssub.s32 1, %s10
  %s13 = scalar_select 0, %s12, %s10
  $region1: #{tpu_custom_call.1} parent=0
    #allocation2 [shape = 'u8[4096]{0}', space=vmem, size = 0x1000, scoped, tag = 'input window, operand 1, single buffered']
    #allocation3 [shape = 's32[1]{0}', space=sflag, size = 0x4, scoped, tag = 'scoped memory for tpu_custom_call.1']
    #allocation4 [shape = 's32[1]{0}', space=sflag, size = 0x4, scoped, tag = 'scoped memory for tpu_custom_call.1']
    #allocation5 [shape = 'u8[512]{0}', space=vmem, size = 0x400, scoped, tag = 'input window, operand 4, single buffered']
    #allocation6 [shape = 's32[1]{0}', space=sflag, size = 0x4, scoped, tag = 'scoped memory for tpu_custom_call.1']
    #allocation7 [shape = 'u8[32768]{0}', space=vmem, size = 0x8000, scoped, tag = 'input window, operand 5, single buffered']
    #allocation8 [shape = 'u8[4096]{0}', space=vmem, size = 0x1000, scoped, tag = 'output window, operand 0, single buffered']
    %14 = vsyncpa [#allocation3], 0
    %15 = vsyncpa [#allocation6], 0
    %16 = vsyncpa [#allocation4], 0
    // Predicated region
    $region2: #{tpu_custom_call.1} parent=1 // pred_check
      _
    $region3: #{tpu_custom_call.1} parent=1 // pred_check_branch
      %18 = sbr.rel (0) target = $region5
    $region4: #{tpu_custom_call.1} parent=1 // pred_region
      _
    $region5: #{tpu_custom_call.1} parent=1 // pred_fallthru
      _
    // Predicated region
    $region6: #{tpu_custom_call.1} parent=1 // pred_check
      _
    $region7: #{tpu_custom_call.1} parent=1 // pred_check_branch
      %20 = sbr.rel (0) target = $region9
    $region8: #{tpu_custom_call.1} parent=1 // pred_region
      %s22 = ssub.s32 128, 128
      %23 = vsyncadd [#allocation3], %s22
      %s24 = sshll.u32 [#allocation2], 4
      %s25 = int_to_ptr.vmem [resolvable:$true] %s24
      %30 = dma.hbm_to_vmem [thread:$0]  %s1, 128, %s25, [#allocation3], 64, 64, 4
    $region9: #{tpu_custom_call.1} parent=1 // pred_fallthru
      _
    // Predicated region
    $region10: #{tpu_custom_call.1} parent=1 // pred_check
      _
    $region11: #{tpu_custom_call.1} parent=1 // pred_check_branch
      %32 = sbr.rel (0) target = $region13
    $region12: #{tpu_custom_call.1} parent=1 // pred_region
      _
    $region13: #{tpu_custom_call.1} parent=1 // pred_fallthru
      _
    // Predicated region
    $region14: #{tpu_custom_call.1} parent=1 // pred_check
      _
    $region15: #{tpu_custom_call.1} parent=1 // pred_check_branch
      %34 = sbr.rel (0) target = $region17
    $region16: #{tpu_custom_call.1} parent=1 // pred_region
      _
    $region17: #{tpu_custom_call.1} parent=1 // pred_fallthru
      _
    // Predicated region
    $region18: #{tpu_custom_call.1} parent=1 // pred_check
      _
    $region19: #{tpu_custom_call.1} parent=1 // pred_check_branch
      %36 = sbr.rel (0) target = $region21
    $region20: #{tpu_custom_call.1} parent=1 // pred_region
      %s38 = ssub.s32 16, 16
      %39 = vsyncadd [#allocation6], %s38
      %s41 = sshll.u32 [#allocation5], 4
      %s42 = int_to_ptr.vmem [resolvable:$true] %s41
      %44 = dma.hbm_to_vmem [thread:$0]  %s4, 16, %s42, [#allocation6]
    $region21: #{tpu_custom_call.1} parent=1 // pred_fallthru
      _
    // Predicated region
    $region22: #{tpu_custom_call.1} parent=1 // pred_check
      _
    $region23: #{tpu_custom_call.1} parent=1 // pred_check_branch
      %46 = sbr.rel (0) target = $region25
    $region24: #{tpu_custom_call.1} parent=1 // pred_region
      %s48 = ssub.s32 1024, 1024
      %49 = vsyncadd [#allocation6], %s48
      %s50 = sshll.u32 [#allocation7], 4
      %s51 = int_to_ptr.vmem [resolvable:$true] %s50
      %56 = dma.hbm_to_vmem [thread:$0]  %s5, 1024, %s51, [#allocation6], 64, 64, 4
    $region25: #{tpu_custom_call.1} parent=1 // pred_fallthru
      _
    // Predicated region
    $region26: #{tpu_custom_call.1} parent=1 // pred_check
      _
    $region27: #{tpu_custom_call.1} parent=1 // pred_check_branch
      %58 = sbr.rel (0) target = $region29
    $region28: #{tpu_custom_call.1} parent=1 // pred_region
      _
    $region29: #{tpu_custom_call.1} parent=1 // pred_fallthru
      _
    // Predicated region
    $region30: #{tpu_custom_call.1} parent=1 // pred_check
      _
    $region31: #{tpu_custom_call.1} parent=1 // pred_check_branch
      %60 = sbr.rel (0) target = $region33
    $region32: #{tpu_custom_call.1} parent=1 // pred_region
      _
    $region33: #{tpu_custom_call.1} parent=1 // pred_fallthru
      _
    // Predicated region
    $region34: #{tpu_custom_call.1} parent=1 // pred_check
      _
    $region35: #{tpu_custom_call.1} parent=1 // pred_check_branch
      %62 = sbr.rel (0) target = $region37
    $region36: #{tpu_custom_call.1} parent=1 // pred_region
      _
    $region37: #{tpu_custom_call.1} parent=1 // pred_fallthru
      _
    // Predicated region
    $region38: #{tpu_custom_call.1} parent=1 // pred_check
      _
    $region39: #{tpu_custom_call.1} parent=1 // pred_check_branch
      %64 = sbr.rel (0) target = $region41
    $region40: #{tpu_custom_call.1} parent=1 // pred_region
      %65 = dma.done [#allocation3], 128
    $region41: #{tpu_custom_call.1} parent=1 // pred_fallthru
      _
    // Predicated region
    $region42: #{tpu_custom_call.1} parent=1 // pred_check
      _
    $region43: #{tpu_custom_call.1} parent=1 // pred_check_branch
      %67 = sbr.rel (0) target = $region45
    $region44: #{tpu_custom_call.1} parent=1 // pred_region
      %68 = dma.done [#allocation6], 16
    $region45: #{tpu_custom_call.1} parent=1 // pred_fallthru
      _
    // Predicated region
    $region46: #{tpu_custom_call.1} parent=1 // pred_check
      _
    $region47: #{tpu_custom_call.1} parent=1 // pred_check_branch
      %70 = sbr.rel (0) target = $region49
    $region48: #{tpu_custom_call.1} parent=1 // pred_region
      %71 = dma.done [#allocation6], 1024
    $region49: #{tpu_custom_call.1} parent=1 // pred_fallthru
      _
    %v73 = vld [vmem:[%s2] sm:$0x1]
    %v74 = vld [vmem:[#allocation5] sm:$0x1]
    %v75 = vld [vmem:[%s6] sm:$0x1]
    %v76 = vld [vmem:[%s8] sm:$0x1]
    %v77 = vld [vmem:[%s0] sm:$0xff]
    %v78 = vpack.c.bf16 %v77, %v77
    %v79 = vld [vmem:[#allocation2] sm:$0xf]
    %v80 = vld [vmem:[#allocation2 + $0x4] sm:$0xf]
    %v82 = vlaneseq
    %v83 = vshrl.u32 %v82, 7
    %v84 = vsub.s32 0, %v83
    %v85 = vrot.slane %v73, %v84
    %v89 = vunpack.c.l.b16 %v79
    %v90 = vunpack.c.l.b16 %v80
    %v91 = vpack.c.b16 %v90, %v89
    %vm93 = vcmask 130048
    %v95 = vsel %vm93, %v78, 0
    %97 = vmatprep.subr.bf16.mxu0 0
    %98 = vmatpush1.bf16.msra.mxu0 0
    %99 = vmatprep.subr.bf16.mxu0 0
    %100 = vmatpush1.bf16.msra.mxu0 0
    %101 = vmatprep.subr.bf16.mxu0 0
    %102 = vmatpush1.bf16.msra.mxu0 0
    %103 = vmatprep.subr.bf16.mxu0 0
    %104 = vmatpush1.bf16.msra.mxu0 0
    %105 = vmatprep.subr.bf16.mxu0 0
    %106 = vmatpush1.bf16.msra.mxu0 0
    %107 = vmatprep.subr.bf16.mxu0 0
    %108 = vmatpush1.bf16.msra.mxu0 0
    %109 = vmatprep.subr.bf16.mxu0 0
    %110 = vmatpush1.bf16.msra.mxu0 0
    %111 = vmatprep.subr.bf16.mxu0 0
    %112 = vmatpush1.bf16.msra.mxu0 %v91
    %113 = vmatprep.subr.bf16.mxu0 0
    %114 = vmatpush2.bf16.msra.mxu0 0
    %115 = vmatprep.subr.bf16.mxu0 0
    %116 = vmatpush2.bf16.msra.mxu0 0
    %117 = vmatprep.subr.bf16.mxu0 0
    %118 = vmatpush2.bf16.msra.mxu0 0
    %119 = vmatprep.subr.bf16.mxu0 0
    %120 = vmatpush2.bf16.msra.mxu0 0
    %121 = vmatprep.subr.bf16.mxu0 0
    %122 = vmatpush2.bf16.msra.mxu0 0
    %123 = vmatprep.subr.bf16.mxu0 0
    %124 = vmatpush2.bf16.msra.mxu0 0
    %125 = vmatprep.subr.bf16.mxu0 0
    %126 = vmatpush2.bf16.msra.mxu0 0
    %127 = vmatprep.subr.bf16.mxu0 0
    %128 = vmatpush2.bf16.msra.mxu0 0
    %129 = vmatprep.mubr.bf16.mxu0 0
    %130 = vmatmul.mubr.bf16.gmra.mxu0 %v95
    %v131 = vpop.f32.mrf.mxu0
    %v132 = vadd.f32 %v85, %v131
    %v133 = vpop.f32.mrf.mxu0
    %v134 = vpop.f32.mrf.mxu0
    %v135 = vpop.f32.mrf.mxu0
    %136 = vdwg.mxu0
    %v137 = vmax.f32 %v132, 0.0
    %v138 = vpack.c.bf16 %v137, %v137
    %v139 = vld [vmem:[%s3] sm:$0xf]
    %v140 = vld [vmem:[%s3 + $0x4] sm:$0xf]
    %v141 = vld [vmem:[%s3 + $0x8] sm:$0xf]
    %v142 = vld [vmem:[%s3 + $0xc] sm:$0xf]
    %v143 = vld [vmem:[%s3 + $0x10] sm:$0xf]
    %v144 = vld [vmem:[%s3 + $0x14] sm:$0xf]
    %v145 = vld [vmem:[%s3 + $0x18] sm:$0xf]
    %v146 = vld [vmem:[%s3 + $0x1c] sm:$0xf]
    %v147 = vld [vmem:[%s3 + $0x20] sm:$0xf]
    %v148 = vld [vmem:[%s3 + $0x24] sm:$0xf]
    %v149 = vld [vmem:[%s3 + $0x28] sm:$0xf]
    %v150 = vld [vmem:[%s3 + $0x2c] sm:$0xf]
    %v151 = vld [vmem:[%s3 + $0x30] sm:$0xf]
    %v152 = vld [vmem:[%s3 + $0x34] sm:$0xf]
    %v153 = vld [vmem:[%s3 + $0x38] sm:$0xf]
    %v154 = vld [vmem:[%s3 + $0x3c] sm:$0xf]
    %v156 = vlaneseq
    %v157 = vshrl.u32 %v156, 7
    %v158 = vsub.s32 0, %v157
    %v159 = vrot.slane %v74, %v158
    %v177 = vunpack.c.l.b16 %v139
    %v178 = vunpack.c.l.b16 %v140
    %v179 = vunpack.c.l.b16 %v141
    %v180 = vunpack.c.l.b16 %v142
    %v181 = vunpack.c.l.b16 %v143
    %v182 = vunpack.c.l.b16 %v144
    %v183 = vunpack.c.l.b16 %v145
    %v184 = vunpack.c.l.b16 %v146
    %v185 = vunpack.c.l.b16 %v147
    %v186 = vunpack.c.l.b16 %v148
    %v187 = vunpack.c.l.b16 %v149
    %v188 = vunpack.c.l.b16 %v150
    %v189 = vunpack.c.l.b16 %v151
    %v190 = vunpack.c.l.b16 %v152
    %v191 = vunpack.c.l.b16 %v153
    %v192 = vunpack.c.l.b16 %v154
    %v193 = vpack.c.b16 %v178, %v177
    %v194 = vpack.c.b16 %v180, %v179
    %v195 = vpack.c.b16 %v182, %v181
    %v196 = vpack.c.b16 %v184, %v183
    %v197 = vpack.c.b16 %v186, %v185
    %v198 = vpack.c.b16 %v188, %v187
    %v199 = vpack.c.b16 %v190, %v189
    %v200 = vpack.c.b16 %v192, %v191
    %209 = vmatprep.subr.bf16.mxu0 0
    %210 = vmatpush1.bf16.msra.mxu0 %v200
    %211 = vmatprep.subr.bf16.mxu0 0
    %212 = vmatpush1.bf16.msra.mxu0 %v199
    %213 = vmatprep.subr.bf16.mxu0 0
    %214 = vmatpush1.bf16.msra.mxu0 %v198
    %215 = vmatprep.subr.bf16.mxu0 0
    %216 = vmatpush1.bf16.msra.mxu0 %v197
    %217 = vmatprep.subr.bf16.mxu0 0
    %218 = vmatpush1.bf16.msra.mxu0 %v196
    %219 = vmatprep.subr.bf16.mxu0 0
    %220 = vmatpush1.bf16.msra.mxu0 %v195
    %221 = vmatprep.subr.bf16.mxu0 0
    %222 = vmatpush1.bf16.msra.mxu0 %v194
    %223 = vmatprep.subr.bf16.mxu0 0
    %224 = vmatpush1.bf16.msra.mxu0 %v193
    %225 = vmatprep.subr.bf16.mxu0 0
    %226 = vmatpush2.bf16.msra.mxu0 0
    %227 = vmatprep.subr.bf16.mxu0 0
    %228 = vmatpush2.bf16.msra.mxu0 0
    %229 = vmatprep.subr.bf16.mxu0 0
    %230 = vmatpush2.bf16.msra.mxu0 0
    %231 = vmatprep.subr.bf16.mxu0 0
    %232 = vmatpush2.bf16.msra.mxu0 0
    %233 = vmatprep.subr.bf16.mxu0 0
    %234 = vmatpush2.bf16.msra.mxu0 0
    %235 = vmatprep.subr.bf16.mxu0 0
    %236 = vmatpush2.bf16.msra.mxu0 0
    %237 = vmatprep.subr.bf16.mxu0 0
    %238 = vmatpush2.bf16.msra.mxu0 0
    %239 = vmatprep.subr.bf16.mxu0 0
    %240 = vmatpush2.bf16.msra.mxu0 0
    %241 = vmatprep.mubr.bf16.mxu0 0
    %242 = vmatmul.mubr.bf16.gmra.mxu0 %v138
    %v243 = vpop.f32.mrf.mxu0
    %v244 = vadd.f32 %v159, %v243
    %v245 = vpop.f32.mrf.mxu0
    %v246 = vpop.f32.mrf.mxu0
    %v247 = vpop.f32.mrf.mxu0
    %248 = vdwg.mxu0
    %v249 = vmax.f32 %v244, 0.0
    %v250 = vpack.c.bf16 %v249, %v249
    %v251 = vld [vmem:[#allocation7] sm:$0xf]
    %v252 = vld [vmem:[#allocation7 + $0x4] sm:$0xf]
    %v253 = vld [vmem:[#allocation7 + $0x8] sm:$0xf]
    %v254 = vld [vmem:[#allocation7 + $0xc] sm:$0xf]
    %v255 = vld [vmem:[#allocation7 + $0x10] sm:$0xf]
    %v256 = vld [vmem:[#allocation7 + $0x14] sm:$0xf]
    %v257 = vld [vmem:[#allocation7 + $0x18] sm:$0xf]
    %v258 = vld [vmem:[#allocation7 + $0x1c] sm:$0xf]
    %v259 = vld [vmem:[#allocation7 + $0x20] sm:$0xf]
    %v260 = vld [vmem:[#allocation7 + $0x24] sm:$0xf]
    %v261 = vld [vmem:[#allocation7 + $0x28] sm:$0xf]
    %v262 = vld [vmem:[#allocation7 + $0x2c] sm:$0xf]
    %v263 = vld [vmem:[#allocation7 + $0x30] sm:$0xf]
    %v264 = vld [vmem:[#allocation7 + $0x34] sm:$0xf]
    %v265 = vld [vmem:[#allocation7 + $0x38] sm:$0xf]
    %v266 = vld [vmem:[#allocation7 + $0x3c] sm:$0xf]
    %v268 = vlaneseq
    %v269 = vshrl.u32 %v268, 7
    %v270 = vsub.s32 0, %v269
    %v271 = vrot.slane %v75, %v270
    %v289 = vunpack.c.l.b16 %v251
    %v290 = vunpack.c.l.b16 %v252
    %v291 = vunpack.c.l.b16 %v253
    %v292 = vunpack.c.l.b16 %v254
    %v293 = vunpack.c.l.b16 %v255
    %v294 = vunpack.c.l.b16 %v256
    %v295 = vunpack.c.l.b16 %v257
    %v296 = vunpack.c.l.b16 %v258
    %v297 = vunpack.c.l.b16 %v259
    %v298 = vunpack.c.l.b16 %v260
    %v299 = vunpack.c.l.b16 %v261
    %v300 = vunpack.c.l.b16 %v262
    %v301 = vunpack.c.l.b16 %v263
    %v302 = vunpack.c.l.b16 %v264
    %v303 = vunpack.c.l.b16 %v265
    %v304 = vunpack.c.l.b16 %v266
    %v305 = vpack.c.b16 %v290, %v289
    %v306 = vpack.c.b16 %v292, %v291
    %v307 = vpack.c.b16 %v294, %v293
    %v308 = vpack.c.b16 %v296, %v295
    %v309 = vpack.c.b16 %v298, %v297
    %v310 = vpack.c.b16 %v300, %v299
    %v311 = vpack.c.b16 %v302, %v301
    %v312 = vpack.c.b16 %v304, %v303
    %321 = vmatprep.subr.bf16.mxu0 0
    %322 = vmatpush1.bf16.msra.mxu0 %v312
    %323 = vmatprep.subr.bf16.mxu0 0
    %324 = vmatpush1.bf16.msra.mxu0 %v311
    %325 = vmatprep.subr.bf16.mxu0 0
    %326 = vmatpush1.bf16.msra.mxu0 %v310
    %327 = vmatprep.subr.bf16.mxu0 0
    %328 = vmatpush1.bf16.msra.mxu0 %v309
    %329 = vmatprep.subr.bf16.mxu0 0
    %330 = vmatpush1.bf16.msra.mxu0 %v308
    %331 = vmatprep.subr.bf16.mxu0 0
    %332 = vmatpush1.bf16.msra.mxu0 %v307
    %333 = vmatprep.subr.bf16.mxu0 0
    %334 = vmatpush1.bf16.msra.mxu0 %v306
    %335 = vmatprep.subr.bf16.mxu0 0
    %336 = vmatpush1.bf16.msra.mxu0 %v305
    %337 = vmatprep.subr.bf16.mxu0 0
    %338 = vmatpush2.bf16.msra.mxu0 0
    %339 = vmatprep.subr.bf16.mxu0 0
    %340 = vmatpush2.bf16.msra.mxu0 0
    %341 = vmatprep.subr.bf16.mxu0 0
    %342 = vmatpush2.bf16.msra.mxu0 0
    %343 = vmatprep.subr.bf16.mxu0 0
    %344 = vmatpush2.bf16.msra.mxu0 0
    %345 = vmatprep.subr.bf16.mxu0 0
    %346 = vmatpush2.bf16.msra.mxu0 0
    %347 = vmatprep.subr.bf16.mxu0 0
    %348 = vmatpush2.bf16.msra.mxu0 0
    %349 = vmatprep.subr.bf16.mxu0 0
    %350 = vmatpush2.bf16.msra.mxu0 0
    %351 = vmatprep.subr.bf16.mxu0 0
    %352 = vmatpush2.bf16.msra.mxu0 0
    %353 = vmatprep.mubr.bf16.mxu0 0
    %354 = vmatmul.mubr.bf16.gmra.mxu0 %v250
    %v355 = vpop.f32.mrf.mxu0
    %v356 = vadd.f32 %v271, %v355
    %v357 = vpop.f32.mrf.mxu0
    %v358 = vpop.f32.mrf.mxu0
    %v359 = vpop.f32.mrf.mxu0
    %360 = vdwg.mxu0
    %v361 = vmax.f32 %v356, 0.0
    %v362 = vpack.c.bf16 %v361, %v361
    %v363 = vld [vmem:[%s7] sm:$0xf]
    %v364 = vld [vmem:[%s7 + $0x4] sm:$0xf]
    %v365 = vld [vmem:[%s7 + $0x8] sm:$0xf]
    %v366 = vld [vmem:[%s7 + $0xc] sm:$0xf]
    %v367 = vld [vmem:[%s7 + $0x10] sm:$0xf]
    %v368 = vld [vmem:[%s7 + $0x14] sm:$0xf]
    %v369 = vld [vmem:[%s7 + $0x18] sm:$0xf]
    %v370 = vld [vmem:[%s7 + $0x1c] sm:$0xf]
    %v371 = vld [vmem:[%s7 + $0x20] sm:$0xf]
    %v372 = vld [vmem:[%s7 + $0x24] sm:$0xf]
    %v373 = vld [vmem:[%s7 + $0x28] sm:$0xf]
    %v374 = vld [vmem:[%s7 + $0x2c] sm:$0xf]
    %v375 = vld [vmem:[%s7 + $0x30] sm:$0xf]
    %v376 = vld [vmem:[%s7 + $0x34] sm:$0xf]
    %v377 = vld [vmem:[%s7 + $0x38] sm:$0xf]
    %v378 = vld [vmem:[%s7 + $0x3c] sm:$0xf]
    %v380 = vlaneseq
    %v381 = vshrl.u32 %v380, 7
    %v382 = vsub.s32 0, %v381
    %v383 = vrot.slane %v76, %v382
    %v401 = vunpack.c.l.b16 %v363
    %v402 = vunpack.c.l.b16 %v364
    %v403 = vunpack.c.l.b16 %v365
    %v404 = vunpack.c.l.b16 %v366
    %v405 = vunpack.c.l.b16 %v367
    %v406 = vunpack.c.l.b16 %v368
    %v407 = vunpack.c.l.b16 %v369
    %v408 = vunpack.c.l.b16 %v370
    %v409 = vunpack.c.l.b16 %v371
    %v410 = vunpack.c.l.b16 %v372
    %v411 = vunpack.c.l.b16 %v373
    %v412 = vunpack.c.l.b16 %v374
    %v413 = vunpack.c.l.b16 %v375
    %v414 = vunpack.c.l.b16 %v376
    %v415 = vunpack.c.l.b16 %v377
    %v416 = vunpack.c.l.b16 %v378
    %v417 = vpack.c.b16 %v402, %v401
    %v418 = vpack.c.b16 %v404, %v403
    %v419 = vpack.c.b16 %v406, %v405
    %v420 = vpack.c.b16 %v408, %v407
    %v421 = vpack.c.b16 %v410, %v409
    %v422 = vpack.c.b16 %v412, %v411
    %v423 = vpack.c.b16 %v414, %v413
    %v424 = vpack.c.b16 %v416, %v415
    %433 = vmatprep.subr.bf16.mxu0 0
    %434 = vmatpush1.bf16.msra.mxu0 %v424
    %435 = vmatprep.subr.bf16.mxu0 0
    %436 = vmatpush1.bf16.msra.mxu0 %v423
    %437 = vmatprep.subr.bf16.mxu0 0
    %438 = vmatpush1.bf16.msra.mxu0 %v422
    %439 = vmatprep.subr.bf16.mxu0 0
    %440 = vmatpush1.bf16.msra.mxu0 %v421
    %441 = vmatprep.subr.bf16.mxu0 0
    %442 = vmatpush1.bf16.msra.mxu0 %v420
    %443 = vmatprep.subr.bf16.mxu0 0
    %444 = vmatpush1.bf16.msra.mxu0 %v419
    %445 = vmatprep.subr.bf16.mxu0 0
    %446 = vmatpush1.bf16.msra.mxu0 %v418
    %447 = vmatprep.subr.bf16.mxu0 0
    %448 = vmatpush1.bf16.msra.mxu0 %v417
    %449 = vmatprep.subr.bf16.mxu0 0
    %450 = vmatpush2.bf16.msra.mxu0 0
    %451 = vmatprep.subr.bf16.mxu0 0
    %452 = vmatpush2.bf16.msra.mxu0 0
    %453 = vmatprep.subr.bf16.mxu0 0
    %454 = vmatpush2.bf16.msra.mxu0 0
    %455 = vmatprep.subr.bf16.mxu0 0
    %456 = vmatpush2.bf16.msra.mxu0 0
    %457 = vmatprep.subr.bf16.mxu0 0
    %458 = vmatpush2.bf16.msra.mxu0 0
    %459 = vmatprep.subr.bf16.mxu0 0
    %460 = vmatpush2.bf16.msra.mxu0 0
    %461 = vmatprep.subr.bf16.mxu0 0
    %462 = vmatpush2.bf16.msra.mxu0 0
    %463 = vmatprep.subr.bf16.mxu0 0
    %464 = vmatpush2.bf16.msra.mxu0 0
    %465 = vmatprep.mubr.bf16.mxu0 0
    %466 = vmatmul.mubr.bf16.gmra.mxu0 %v362
    %v467 = vpop.f32.mrf.mxu0
    %v468 = vadd.f32 %v383, %v467
    %v469 = vpop.f32.mrf.mxu0
    %v470 = vpop.f32.mrf.mxu0
    %v471 = vpop.f32.mrf.mxu0
    %472 = vdwg.mxu0
    %v473 = vtanh.pop %v468
    %vm474 = vcmask 64512
    %475 = vst.msk [vmem:[#allocation8] sm:$0xff] %vm474, %v473
    // Predicated region
    $region50: #{tpu_custom_call.1} parent=1 // pred_check
      _
    $region51: #{tpu_custom_call.1} parent=1 // pred_check_branch
      %477 = sbr.rel (0) target = $region53
    $region52: #{tpu_custom_call.1} parent=1 // pred_region
      %s479 = ssub.s32 128, 128
      %480 = vsyncadd [#allocation4], %s479
      %s482 = sshll.u32 [#allocation8], 4
      %s483 = int_to_ptr.vmem [resolvable:$true] %s482
      %485 = dma.vmem_to_hbm [thread:$0]  %s483, 128, %s9, [#allocation4]
    $region53: #{tpu_custom_call.1} parent=1 // pred_fallthru
      _
    // Predicated region
    $region54: #{tpu_custom_call.1} parent=1 // pred_check
      _
    $region55: #{tpu_custom_call.1} parent=1 // pred_check_branch
      %487 = sbr.rel (0) target = $region57
    $region56: #{tpu_custom_call.1} parent=1 // pred_region
      %488 = dma.done [#allocation4], 128
    $region57: #{tpu_custom_call.1} parent=1 // pred_fallthru
      _
    %489 = vsyncpa [#allocation3], 1
    %490 = vsyncpa [#allocation6], 1
    %491 = vsyncpa [#allocation4], 1

</llo_original>
